<compile_context>
chip_gen: v5e
topology: v5e:2x2
jax: 0.10.0
libtpu: 0.0.40
codegen_flags: <defaults>
</compile_context>

<pallas_src>
import jax
import jax.numpy as jnp
from jax.experimental import pallas as pl
from jax.experimental.pallas import tpu as pltpu


def _yolo_head_kernel(x_ref, w_ref, b_ref, out_ref):
    """One (batch, anchor-tile) block: projection with xyxy decode pre-folded."""
    # x_ref:   (C, TA)       activations, anchors on the lane axis
    # w_ref:   (C, NO_PAD)   folded head weights ([x1 y1 x2 y2 | scores | 0...])
    # b_ref:   (1, NO_PAD)   folded head bias, float32
    # out_ref: (TA, NO_PAD)  lane-dense combined output
    #
    # Contract over C with the transposed-LHS operand directly on the MXU:
    # no wrapper-side transpose, no extra HBM pass over the activations.
    # NOTE: intended lowering is a native transposed vmatmul; if a Mosaic dump
    # ever shows a vxpose of the (C, TA) tile, switch to pl.dot(trans_a=True).
    pred = jax.lax.dot_general(
        x_ref[...], w_ref[...],
        dimension_numbers=(((0,), (0,)), ((), ())),
        preferred_element_type=jnp.float32)            # (TA, NO_PAD) f32
    out_ref[...] = (pred + b_ref[...]).astype(out_ref.dtype)


def wrapped_model_forward(x_nchw, w_proj, b_proj, nc, *,
                          block_anchors=2048, out_dtype=jnp.float32):
    """Reproduce WrappedModel.forward.

    Args:
      x_nchw: (bs, C, H, W) input (PyTorch NCHW convention), any float dtype.
      w_proj: (C, 4+nc) synthetic head weight (cx, cy, w, h, class scores).
      b_proj: (4+nc,)   synthetic head bias.
      nc:     number of classes.
      block_anchors: target anchor-axis tile size (rounded to 128 multiples;
                     the actual tile divides ceil(A/128)*128 exactly so there
                     is no padded-anchor write waste beyond 128-alignment).
      out_dtype: dtype of the kernel's combined output slab (f32 default;
                 bf16 halves write traffic if downstream tolerates it).

    Returns:
      [boxes (bs, anchors, 1, 4), scores (bs, anchors, nc)]
    """
    bs, C, H, W = x_nchw.shape
    A = H * W                                   # anchors
    no = 4 + nc

    # Lane-dense padded output width: [boxes(4) | scores(nc) | zeros...]
    no_pad = max(128, pl.cdiv(no, 128) * 128)

    # ---- anchor tiling ------------------------------------------------------
    n128 = pl.cdiv(A, 128)                      # 128-anchor lane groups
    a_out = n128 * 128                          # output anchor extent (aligned)
    target_tiles = max(1, pl.cdiv(a_out, max(128, block_anchors)))
    if bs == 1:
        target_tiles = max(target_tiles, 2)     # feed both v7x TensorCores
    target_tiles = min(target_tiles, n128)
    # Smallest tile count >= target that divides n128 exactly -> zero anchor
    # padding beyond the 128 alignment (no 22%-style a_pad waste).
    num_a = next(t for t in range(target_tiles, n128 + 1) if n128 % t == 0)
    ta = (n128 // num_a) * 128                  # multiple of 128; num_a*ta == a_out

    # NCHW -> (bs, C, A): contiguous metadata reshape only (no HBM pass,
    # no jnp.pad, no dtype cast).  If A is not a multiple of 128 the ragged
    # last input tile is handled by Pallas; the bias-only pad rows land in
    # output anchors [A, a_out) and are sliced off below.
    x_cma = x_nchw.reshape(bs, C, A)

    # ---- fold xywh->xyxy into the head weights / bias (tiny one-off) --------
    w = w_proj.astype(jnp.float32)
    b = b_proj.astype(jnp.float32)
    w_box = jnp.stack([w[:, 0] - 0.5 * w[:, 2],
                       w[:, 1] - 0.5 * w[:, 3],
                       w[:, 0] + 0.5 * w[:, 2],
                       w[:, 1] + 0.5 * w[:, 3]], axis=1)
    b_box = jnp.stack([b[0] - 0.5 * b[2],
                       b[1] - 0.5 * b[3],
                       b[0] + 0.5 * b[2],
                       b[1] + 0.5 * b[3]])
    w_pad = jnp.zeros((C, no_pad), jnp.float32)
    w_pad = w_pad.at[:, :4].set(w_box).at[:, 4:4 + nc].set(w[:, 4:])
    w_pad = w_pad.astype(x_cma.dtype)           # match activation dtype on the MXU
    b_pad = jnp.zeros((no_pad,), jnp.float32)
    b_pad = b_pad.at[:4].set(b_box).at[4:4 + nc].set(b[4:])
    b_pad = b_pad.reshape(1, no_pad)

    grid_spec = pltpu.PrefetchScalarGridSpec(
        num_scalar_prefetch=0,
        grid=(bs, num_a),
        in_specs=[
            pl.BlockSpec((pl.Squeezed(), C, ta), lambda bi, ai: (bi, 0, ai)),
            pl.BlockSpec((C, no_pad), lambda bi, ai: (0, 0)),
            pl.BlockSpec((1, no_pad), lambda bi, ai: (0, 0)),
        ],
        out_specs=pl.BlockSpec((pl.Squeezed(), ta, no_pad),
                               lambda bi, ai: (bi, ai, 0)),
    )

    out = pl.pallas_call(
        _yolo_head_kernel,
        out_shape=jax.ShapeDtypeStruct((bs, a_out, no_pad), out_dtype),
        grid_spec=grid_spec,
        compiler_params=pltpu.CompilerParams(
            dimension_semantics=("parallel", "parallel"),
            vmem_limit_bytes=32 * 1024 * 1024),
    )(x_cma, w_pad, b_pad)

    # Module-interface split / reshape.  Consumers that can read the padded
    # lane-dense slab (boxes at lanes 0:4, scores at 4:4+nc) directly should
    # skip this step — it costs one extra HBM pass over the slab.
    out = out[:, :A, :]
    boxes = out[..., :4].reshape(bs, A, 1, 4)
    scores = out[..., 4:4 + nc]
    return [boxes, scores]


def _reference_forward(x_nchw, w_proj, b_proj, nc):
    """Pure-JAX reference mirroring the PyTorch code exactly."""
    bs, C, H, W = x_nchw.shape
    A = H * W
    # synthetic inner model: prediction of shape (bs, 4+nc, anchors)
    x_flat = x_nchw.reshape(bs, C, A)
    prediction = jnp.einsum("co,bca->boa", w_proj, x_flat) + b_proj[None, :, None]
    # WrappedModel.forward
    prediction = jnp.transpose(prediction, (0, 2, 1))          # transpose(2, 1)
    boxes, scores = prediction[..., :4], prediction[..., 4:]   # split([4, nc])
    cx, cy, wd, ht = (boxes[..., 0], boxes[..., 1], boxes[..., 2], boxes[..., 3])
    boxes = jnp.stack([cx - wd / 2, cy - ht / 2, cx + wd / 2, cy + ht / 2], axis=-1)
    return [boxes.reshape(bs, A, 1, 4), scores]


if __name__ == "__main__":
    key = jax.random.PRNGKey(0)
    k_x, k_w, k_b = jax.random.split(key, 3)

    bs, C, H, W = 2, 4, 16, 16
    nc = 16                      # number of classes of the wrapped model
    no = 4 + nc

    x = jax.random.normal(k_x, (bs, C, H, W), dtype=jnp.float32)
    w_proj = jax.random.normal(k_w, (C, no), dtype=jnp.float32) * 0.1
    b_proj = jax.random.normal(k_b, (no,), dtype=jnp.float32) * 0.1

    ref_boxes, ref_scores = _reference_forward(x, w_proj, b_proj, nc)

    # Default tiling (single anchor tile per batch element at this small A).
    boxes, scores = wrapped_model_forward(x, w_proj, b_proj, nc)
    jax.block_until_ready(boxes)
    jax.block_until_ready(scores)
    assert boxes.shape == (bs, H * W, 1, 4)
    assert scores.shape == (bs, H * W, nc)
    assert jnp.allclose(boxes, ref_boxes, atol=1e-3, rtol=1e-3)
    assert jnp.allclose(scores, ref_scores, atol=1e-3, rtol=1e-3)

    # Multi-tile anchor grid (exercises the (bs, num_a) grid).
    boxes2, scores2 = wrapped_model_forward(x, w_proj, b_proj, nc,
                                            block_anchors=128)
    jax.block_until_ready(boxes2)
    assert jnp.allclose(boxes2, ref_boxes, atol=1e-3, rtol=1e-3)
    assert jnp.allclose(scores2, ref_scores, atol=1e-3, rtol=1e-3)

    # bs == 1 path: forces >= 2 anchor tiles so megacore has work to split.
    boxes1, scores1 = wrapped_model_forward(x[:1], w_proj, b_proj, nc)
    jax.block_until_ready(boxes1)
    assert jnp.allclose(boxes1, ref_boxes[:1], atol=1e-3, rtol=1e-3)
    assert jnp.allclose(scores1, ref_scores[:1], atol=1e-3, rtol=1e-3)

    print("KERNEL_OK")
</pallas_src>

<mosaic_0001>
module attributes {stable_mosaic.version = 11 : i64} {
  func.func @_yolo_head_kernel(%arg0: i32, %arg1: i32, %arg2: memref<1x4x256xf32, #tpu.memory_space<vmem>>, %arg3: memref<4x128xf32, #tpu.memory_space<vmem>>, %arg4: memref<1x128xf32, #tpu.memory_space<vmem>>, %arg5: memref<1x256x128xf32, #tpu.memory_space<vmem>>) attributes {dimension_semantics = [#tpu.dimension_semantics<parallel>, #tpu.dimension_semantics<parallel>], iteration_bounds = array<i64: 2, 1>, scalar_prefetch = 0 : i64, scratch_operands = 0 : i64, tpu.core_type = #tpu.core_type<tc>, window_params = [{transform_indices = @transform_0, window_bounds = array<i64: 1, 4, 256>}, {pipeline_mode = #tpu.pipeline_mode<synchronous>, transform_indices = @transform_1, window_bounds = array<i64: 4, 128>}, {pipeline_mode = #tpu.pipeline_mode<synchronous>, transform_indices = @transform_2, window_bounds = array<i64: 1, 128>}, {transform_indices = @transform_3, window_bounds = array<i64: 1, 256, 128>}]} {
    %c0 = arith.constant 0 : index
    %c0_0 = arith.constant 0 : index
    %c0_1 = arith.constant 0 : index
    %0 = vector.load %arg2[%c0, %c0_0, %c0_1] : memref<1x4x256xf32, #tpu.memory_space<vmem>>, vector<1x4x256xf32>
    %1 = vector.shape_cast %0 : vector<1x4x256xf32> to vector<4x256xf32>
    %c0_2 = arith.constant 0 : index
    %c0_3 = arith.constant 0 : index
    %2 = vector.load %arg3[%c0_2, %c0_3] : memref<4x128xf32, #tpu.memory_space<vmem>>, vector<4x128xf32>
    %cst = arith.constant dense<0.000000e+00> : vector<256x128xf32>
    %3 = tpu.matmul %1, %2, %cst {dimension_numbers = #tpu.dot_dimension_numbers<[0], [0], [1], [1], [0, 1, 1, 1], [], []>} : vector<4x256xf32>, vector<4x128xf32>, vector<256x128xf32> -> vector<256x128xf32>
    %c0_4 = arith.constant 0 : index
    %c0_5 = arith.constant 0 : index
    %4 = vector.load %arg4[%c0_4, %c0_5] : memref<1x128xf32, #tpu.memory_space<vmem>>, vector<1x128xf32>
    %5 = vector.broadcast %4 : vector<1x128xf32> to vector<256x128xf32>
    %6 = arith.addf %3, %5 : vector<256x128xf32>
    %c0_6 = arith.constant 0 : index
    %c0_7 = arith.constant 0 : index
    %c0_8 = arith.constant 0 : index
    %7 = vector.load %arg5[%c0_6, %c0_7, %c0_8] : memref<1x256x128xf32, #tpu.memory_space<vmem>>, vector<1x256x128xf32>
    %8 = vector.shape_cast %7 : vector<1x256x128xf32> to vector<256x128xf32>
    %9 = vector.shape_cast %6 : vector<256x128xf32> to vector<1x256x128xf32>
    tpu.vector_store %arg5[%c0_6, %c0_7, %c0_8], %9 {strides = array<i32>} : memref<1x256x128xf32, #tpu.memory_space<vmem>>, vector<1x256x128xf32>,
    return
  }
  func.func @transform_0(%arg0: i32, %arg1: i32) -> (i32, i32, i32) {
    %c0_i32 = arith.constant 0 : i32
    %c0_i32_0 = arith.constant 0 : i32
    return %arg0, %c0_i32, %arg1 : i32, i32, i32
  }
  func.func @transform_1(%arg0: i32, %arg1: i32) -> (i32, i32) {
    %c0_i32 = arith.constant 0 : i32
    %c0_i32_0 = arith.constant 0 : i32
    %c0_i32_1 = arith.constant 0 : i32
    return %c0_i32, %c0_i32_0 : i32, i32
  }
  func.func @transform_2(%arg0: i32, %arg1: i32) -> (i32, i32) {
    %c0_i32 = arith.constant 0 : i32
    %c0_i32_0 = arith.constant 0 : i32
    %c0_i32_1 = arith.constant 0 : i32
    return %c0_i32, %c0_i32_0 : i32, i32
  }
  func.func @transform_3(%arg0: i32, %arg1: i32) -> (i32, i32, i32) {
    %c0_i32 = arith.constant 0 : i32
    %c0_i32_0 = arith.constant 0 : i32
    return %arg0, %arg1, %c0_i32 : i32, i32, i32
  }
}

</mosaic_0001>

<llo_original>
// kernel: tpu_custom_call.1
$region0: #{tpu_custom_call.1}
  #allocation0 [shape = 'u32[]', space=smem, size = 0x4, offset = 0x4, fixed_abs, tag = 'smem constant byte address 0x4 - core index']
  #allocation1 [shape = 'u32[72,128]{1,0:T(1,128)}', space=vmem, size = 0x9000, scoped, tag = 'internal scratch']
  %s0 = inlined_call_operand.hbm [shape: f32[2,4,256], index: 0, kind: input, shape index: {}]
  %s1 = inlined_call_operand.hbm [shape: f32[4,128], index: 1, kind: input, shape index: {}]
  %s2 = inlined_call_operand.vmem [shape: f32[1,128], index: 2, kind: input, shape index: {}]
  %s3 = inlined_call_operand.hbm [shape: f32[2,256,128], index: 3, kind: output, shape index: {}]
  %s4 = sld [smem:[#allocation0]]
  $region53: #{tpu_custom_call.1} parent=0
    _
  %s6 = ssub.s32 1, %s4
  %s7 = scalar_select 0, %s6, %s4
  $region1: #{tpu_custom_call.1} parent=0
    #allocation2 [shape = 'u8[8192]{0}', space=vmem, size = 0x2000, scoped, tag = 'input window, operand 0']
    #allocation3 [shape = 's32[2]{0}', space=sflag, size = 0x8, scoped, tag = 'scoped memory for tpu_custom_call.1']
    #allocation4 [shape = 's32[2]{0}', space=sflag, size = 0x8, scoped, tag = 'scoped memory for tpu_custom_call.1']
    #allocation5 [shape = 'u8[2048]{0}', space=vmem, size = 0x800, scoped, tag = 'input window, operand 1, single buffered']
    #allocation6 [shape = 's32[1]{0}', space=sflag, size = 0x4, scoped, tag = 'scoped memory for tpu_custom_call.1']
    #allocation7 [shape = 'u8[262144]{0}', space=vmem, size = 0x40000, scoped, tag = 'output window, operand 0']
    %8 = vsyncpa [#allocation3], 0
    %s9 = scalar_lea.sflag [#allocation3], 1
    %10 = vsyncpa %s9, 0
    %11 = vsyncpa [#allocation6], 0
    %12 = vsyncpa [#allocation4], 0
    %s13 = scalar_lea.sflag [#allocation4], 1
    %14 = vsyncpa %s13, 0
    loop: start=0, step=1, limit=4
    $region2: #{tpu_custom_call.1} parent=1 // loop_pre_header
      _
    $region3: #{tpu_custom_call.1} parent=1 // loop_header
      %s16 = sphi 0, %s20
      %p17 = scmp.ge.s32.totalorder %s16, 4
      %s23 = sphi 0, %s35
      %s24 = sphi 0, %s31
      %s25 = sphi 0, %s23
      %s26 = sphi 0, %s24
      %s27 = sphi 0, %s25
      %s28 = sphi 0, %s26
      %s40 = sphi 0, %s42
      %s43 = sphi 0, %s40
      %s44 = sphi 0, %s43
      %s60 = sphi 0, %s44
      %s64 = sphi 0, %s64
      %s66 = sphi 0, %s64
      %s67 = sphi 0, %s66
      %s81 = sphi 0, %s67
      %s85 = sphi 0, %s85
      %s87 = sphi 0, %s85
      %s88 = sphi 0, %s87
      %s102 = sphi 0, %s88
      %s110 = sphi 0, %s112
      %s113 = sphi 0, %s110
      %s114 = sphi 0, %s113
      %s130 = sphi 0, %s114
    $region4: #{tpu_custom_call.1} parent=1 // loop_header_branch
      %19 = sbr.rel (%p17) target = $region8
    $region5: #{tpu_custom_call.1} parent=1 // loop_body
      %s21 = ssub.s32 %s16, 1
      %s22 = ssub.s32 %s16, 2
      %s29 = sadd.s32 1, %s24
      %p30 = scmp.ge.s32.totalorder %s29, 1
      %s31 = scalar_select %p30, 0, %s29
      %s32 = sadd.s32 1, %s23
      %s33 = scalar_select %p30, %s32, %s23
      %p34 = scmp.ge.s32.totalorder %s33, 2
      %s35 = scalar_select %p34, 0, %s33
      %s36 = ssub.s32 %s23, %s35
      %s37 = ssub.s32 %s24, %s31
      %s38 = sor.u32 %s36, %s37
      %p39 = scmp.eq.s32.totalorder %s38, 0
      %s41 = sadd.s32 %s40, 1
      %s42 = scalar_select %p39, %s40, %s41
      %p45 = pneg %p39
      %p46 = scmp.eq.s32.totalorder %s16, 1
      %p47 = por %p45, %p46
      %p48 = scmp.ne.s32.totalorder %s40, %s43
      %p49 = scmp.eq.s32.totalorder %s16, 0
      %p50 = por %p48, %p49
      %p51 = scmp.ne.s32.totalorder %s40, %s43
      %p52 = scmp.eq.s32.totalorder %s21, 1
      %p53 = por %p51, %p52
      %p54 = scmp.ne.s32.totalorder %s43, %s44
      %p55 = scmp.eq.s32.totalorder %s21, 0
      %p56 = por %p54, %p55
      %p57 = scmp.ne.s32.totalorder %s43, %s44
      %p58 = scmp.eq.s32.totalorder %s22, 1
      %p59 = por %p57, %p58
      %p61 = scmp.ne.s32.totalorder %s44, %s60
      %p62 = scmp.eq.s32.totalorder %s22, 0
      %p63 = por %p61, %p62
      %s65 = sadd.s32 %s64, 1
      %p68 = scmp.eq.s32.totalorder %s16, 1
      %p69 = scmp.ne.s32.totalorder %s64, %s66
      %p70 = scmp.eq.s32.totalorder %s16, 0
      %p71 = por %p69, %p70
      %p72 = scmp.ne.s32.totalorder %s64, %s66
      %p73 = scmp.eq.s32.totalorder %s21, 1
      %p74 = por %p72, %p73
      %p75 = scmp.ne.s32.totalorder %s66, %s67
      %p76 = scmp.eq.s32.totalorder %s21, 0
      %p77 = por %p75, %p76
      %p78 = scmp.ne.s32.totalorder %s66, %s67
      %p79 = scmp.eq.s32.totalorder %s22, 1
      %p80 = por %p78, %p79
      %p82 = scmp.ne.s32.totalorder %s67, %s81
      %p83 = scmp.eq.s32.totalorder %s22, 0
      %p84 = por %p82, %p83
      %s86 = sadd.s32 %s85, 1
      %p89 = scmp.eq.s32.totalorder %s16, 1
      %p90 = scmp.ne.s32.totalorder %s85, %s87
      %p91 = scmp.eq.s32.totalorder %s16, 0
      %p92 = por %p90, %p91
      %p93 = scmp.ne.s32.totalorder %s85, %s87
      %p94 = scmp.eq.s32.totalorder %s21, 1
      %p95 = por %p93, %p94
      %p96 = scmp.ne.s32.totalorder %s87, %s88
      %p97 = scmp.eq.s32.totalorder %s21, 0
      %p98 = por %p96, %p97
      %p99 = scmp.ne.s32.totalorder %s87, %s88
      %p100 = scmp.eq.s32.totalorder %s22, 1
      %p101 = por %p99, %p100
      %p103 = scmp.ne.s32.totalorder %s88, %s102
      %p104 = scmp.eq.s32.totalorder %s22, 0
      %p105 = por %p103, %p104
      %s106 = ssub.s32 %s23, %s35
      %s107 = ssub.s32 %s24, %s31
      %s108 = sor.u32 %s106, %s107
      %p109 = scmp.eq.s32.totalorder %s108, 0
      %s111 = sadd.s32 %s110, 1
      %s112 = scalar_select %p109, %s110, %s111
      %p115 = pneg %p109
      %p116 = scmp.eq.s32.totalorder %s16, 1
      %p117 = por %p115, %p116
      %p118 = scmp.ne.s32.totalorder %s110, %s113
      %p119 = scmp.eq.s32.totalorder %s16, 0
      %p120 = por %p118, %p119
      %p121 = scmp.ne.s32.totalorder %s110, %s113
      %p122 = scmp.eq.s32.totalorder %s21, 1
      %p123 = por %p121, %p122
      %p124 = scmp.ne.s32.totalorder %s113, %s114
      %p125 = scmp.eq.s32.totalorder %s21, 0
      %p126 = por %p124, %p125
      %p127 = scmp.ne.s32.totalorder %s113, %s114
      %p128 = scmp.eq.s32.totalorder %s22, 1
      %p129 = por %p127, %p128
      %p131 = scmp.ne.s32.totalorder %s114, %s130
      %p132 = scmp.eq.s32.totalorder %s22, 0
      %p133 = por %p131, %p132
      %p134 = scmp.le.s32.totalorder 1, %s16
      %p135 = scmp.lt.s32.totalorder %s16, 3
      %p136 = pnand %p134, %p135
      %p137 = pneg %p136
      // Predicated region
      $region9: #{tpu_custom_call.1} parent=5 // pred_check
        _
      $region10: #{tpu_custom_call.1} parent=5 // pred_check_branch
        %139 = sbr.rel (%p136) target = $region12
      $region11: #{tpu_custom_call.1} parent=5 // pred_region
        %s140 = ssub.s32 %s16, 1
        // Predicated region
        $region13: #{tpu_custom_call.1} parent=11 // pred_check
          %p141 = pneg %p77
        $region14: #{tpu_custom_call.1} parent=11 // pred_check_branch
          %143 = sbr.rel (%p141) target = $region16
        $region15: #{tpu_custom_call.1} parent=11 // pred_region
          %145 = vsyncadd [#allocation6], 0
          %s147 = sshll.u32 %s1, 4
          %s148 = int_to_ptr.hbm [resolvable:$true] %s147
          %s149 = sshll.u32 [#allocation5], 4
          %s150 = int_to_ptr.vmem [resolvable:$true] %s149
          %152 = dma.hbm_to_vmem [thread:$0]  %s148, 64, %s150, [#allocation6]
        $region16: #{tpu_custom_call.1} parent=11 // pred_fallthru
          _
        // Predicated region
        $region17: #{tpu_custom_call.1} parent=11 // pred_check
          %p153 = pneg %p98
        $region18: #{tpu_custom_call.1} parent=11 // pred_check_branch
          %155 = sbr.rel (%p153) target = $region20
        $region19: #{tpu_custom_call.1} parent=11 // pred_region
          _
        $region20: #{tpu_custom_call.1} parent=11 // pred_fallthru
          _
      $region12: #{tpu_custom_call.1} parent=5 // pred_fallthru
        _
      %p156 = scmp.lt.s32.totalorder %s16, 2
      // Predicated region
      $region21: #{tpu_custom_call.1} parent=5 // pred_check
        %p157 = pneg %p156
      $region22: #{tpu_custom_call.1} parent=5 // pred_check_branch
        %159 = sbr.rel (%p157) target = $region24
      $region23: #{tpu_custom_call.1} parent=5 // pred_region
        // Predicated region
        $region25: #{tpu_custom_call.1} parent=23 // pred_check
          %p160 = pneg %p50
        $region26: #{tpu_custom_call.1} parent=23 // pred_check_branch
          %162 = sbr.rel (%p160) target = $region28
        $region27: #{tpu_custom_call.1} parent=23 // pred_region
          %s163 = sand.u32 %s40, 1
          %s164 = scalar_lea.sflag [#allocation3], %s163
          %s165 = sand.u32 %s40, 1
          %s166 = smul.addr %s165, 8
          %s167 = scalar_lea.vmem [#allocation2], %s166
          %s168 = smul.u32 2, %s24
          %170 = vsyncadd %s164, 0
          %s171 = smul.addr %s23, 2
          %s172 = sadd.s32 %s168, %s171
          %s173 = smul.addr %s172, 4
          %s174 = scalar_lea.hbm %s0, %s173
          %s176 = sshll.u32 %s174, 4
          %s177 = int_to_ptr.hbm [resolvable:$true] %s176
          %s178 = sshll.u32 %s167, 4
          %s179 = int_to_ptr.vmem [resolvable:$true] %s178
          %181 = dma.hbm_to_vmem [thread:$0]  %s177, 128, %s179, %s164
        $region28: #{tpu_custom_call.1} parent=23 // pred_fallthru
          _
      $region24: #{tpu_custom_call.1} parent=5 // pred_fallthru
        _
      %p182 = scmp.le.s32.totalorder 1, %s16
      %p183 = scmp.lt.s32.totalorder %s16, 3
      %p184 = pnand %p182, %p183
      %p185 = pneg %p184
      // Predicated region
      $region29: #{tpu_custom_call.1} parent=5 // pred_check
        _
      $region30: #{tpu_custom_call.1} parent=5 // pred_check_branch
        %187 = sbr.rel (%p184) target = $region32
      $region31: #{tpu_custom_call.1} parent=5 // pred_region
        %s188 = ssub.s32 %s16, 1
        %s189 = sand.u32 %s43, 1
        %s190 = scalar_lea.sflag [#allocation3], %s189
        %s191 = sand.u32 %s43, 1
        %s192 = smul.addr %s191, 8
        %s193 = scalar_lea.vmem [#allocation2], %s192
        // Predicated region
        $region33: #{tpu_custom_call.1} parent=31 // pred_check
          %p194 = pneg %p56
        $region34: #{tpu_custom_call.1} parent=31 // pred_check_branch
          %196 = sbr.rel (%p194) target = $region36
        $region35: #{tpu_custom_call.1} parent=31 // pred_region
          %198 = dma.done %s190, 128
        $region36: #{tpu_custom_call.1} parent=31 // pred_fallthru
          _
        // Predicated region
        $region37: #{tpu_custom_call.1} parent=31 // pred_check
          %p199 = pneg %p77
        $region38: #{tpu_custom_call.1} parent=31 // pred_check_branch
          %201 = sbr.rel (%p199) target = $region40
        $region39: #{tpu_custom_call.1} parent=31 // pred_region
          %203 = dma.done [#allocation6], 64
        $region40: #{tpu_custom_call.1} parent=31 // pred_fallthru
          _
        %s204 = sand.u32 %s43, 1
        %s205 = scalar_lea.sflag [#allocation3], %s204
        %s206 = sand.u32 %s43, 1
        %s207 = smul.addr %s206, 8
        %s208 = scalar_lea.vmem [#allocation2], %s207
        %p209 = pneg %p56
        %p210 = pneg %p53
        %p211 = pneg %p77
        %p212 = pneg %p74
        %p213 = pneg %p98
        %p214 = pneg %p95
        %p215 = pneg %p126
        %p216 = pneg %p123
        %s217 = sand.u32 %s113, 1
        %s218 = scalar_lea.sflag [#allocation4], %s217
        %s219 = sand.u32 %s113, 1
        %s220 = smul.addr %s219, 256
        %s221 = scalar_lea.vmem [#allocation7], %s220
        %s222 = smul.u32 2, %s26
        %s223 = smul.u32 32, %s26
        %v224 = vld [vmem:[%s193] sm:$0xff]
        %v225 = vld [vmem:[#allocation5] sm:$0xf]
        %v226 = vld [vmem:[%s2] sm:$0x1]
        %v228 = vperm.slane %v226, 0
        %231 = vst [vmem:[#allocation1] ss:$2 sm:$0xff] %v224
        %v232 = vld.sshfl [vmem:[#allocation1] sm:$0xff pattern:$0x75316420]
        %v233 = vld.sshfl [vmem:[#allocation1 + $0x8] sm:$0xff pattern:$0x75316420]
        %236 = vxpose.xlu0.b32.start [1/16] %v232, 128
        %237 = vxpose.xlu0.b32.cont [2/16] 0.0, 128
        %238 = vxpose.xlu0.b32.cont [3/16] 0.0, 128
        %239 = vxpose.xlu0.b32.cont [4/16] 0.0, 128
        %240 = vxpose.xlu0.b32.cont [5/16] 0.0, 128
        %241 = vxpose.xlu0.b32.cont [6/16] 0.0, 128
        %242 = vxpose.xlu0.b32.cont [7/16] 0.0, 128
        %243 = vxpose.xlu0.b32.cont [8/16] 0.0, 128
        %244 = vxpose.xlu0.b32.cont [9/16] 0.0, 128
        %245 = vxpose.xlu0.b32.cont [10/16] 0.0, 128
        %246 = vxpose.xlu0.b32.cont [11/16] 0.0, 128
        %247 = vxpose.xlu0.b32.cont [12/16] 0.0, 128
        %248 = vxpose.xlu0.b32.cont [13/16] 0.0, 128
        %249 = vxpose.xlu0.b32.cont [14/16] 0.0, 128
        %250 = vxpose.xlu0.b32.cont [15/16] 0.0, 128
        %251 = vxpose.xlu0.b32.end [16/16] 0.0, 128
        %v252 = vpop.trf.xlu0
        %v253 = vpop.trf.xlu0
        %v254 = vpop.trf.xlu0
        %v255 = vpop.trf.xlu0
        %v256 = vpop.trf.xlu0
        %v257 = vpop.trf.xlu0
        %v258 = vpop.trf.xlu0
        %v259 = vpop.trf.xlu0
        %v260 = vpop.trf.xlu0
        %v261 = vpop.trf.xlu0
        %v262 = vpop.trf.xlu0
        %v263 = vpop.trf.xlu0
        %v264 = vpop.trf.xlu0
        %v265 = vpop.trf.xlu0
        %v266 = vpop.trf.xlu0
        %v267 = vpop.trf.xlu0
        %268 = vxpose.xlu0.b32.start [1/16] %v233, 128
        %269 = vxpose.xlu0.b32.cont [2/16] 0.0, 128
        %270 = vxpose.xlu0.b32.cont [3/16] 0.0, 128
        %271 = vxpose.xlu0.b32.cont [4/16] 0.0, 128
        %272 = vxpose.xlu0.b32.cont [5/16] 0.0, 128
        %273 = vxpose.xlu0.b32.cont [6/16] 0.0, 128
        %274 = vxpose.xlu0.b32.cont [7/16] 0.0, 128
        %275 = vxpose.xlu0.b32.cont [8/16] 0.0, 128
        %276 = vxpose.xlu0.b32.cont [9/16] 0.0, 128
        %277 = vxpose.xlu0.b32.cont [10/16] 0.0, 128
        %278 = vxpose.xlu0.b32.cont [11/16] 0.0, 128
        %279 = vxpose.xlu0.b32.cont [12/16] 0.0, 128
        %280 = vxpose.xlu0.b32.cont [13/16] 0.0, 128
        %281 = vxpose.xlu0.b32.cont [14/16] 0.0, 128
        %282 = vxpose.xlu0.b32.cont [15/16] 0.0, 128
        %283 = vxpose.xlu0.b32.end [16/16] 0.0, 128
        %v284 = vpop.trf.xlu0
        %v285 = vpop.trf.xlu0
        %v286 = vpop.trf.xlu0
        %v287 = vpop.trf.xlu0
        %v288 = vpop.trf.xlu0
        %v289 = vpop.trf.xlu0
        %v290 = vpop.trf.xlu0
        %v291 = vpop.trf.xlu0
        %v292 = vpop.trf.xlu0
        %v293 = vpop.trf.xlu0
        %v294 = vpop.trf.xlu0
        %v295 = vpop.trf.xlu0
        %v296 = vpop.trf.xlu0
        %v297 = vpop.trf.xlu0
        %v298 = vpop.trf.xlu0
        %v299 = vpop.trf.xlu0
        %vm300 = vcmask 31744
        %v302 = vsel %vm300, %v252, 0
        %v305 = vsel %vm300, %v253, 0
        %v308 = vsel %vm300, %v254, 0
        %v311 = vsel %vm300, %v255, 0
        %v314 = vsel %vm300, %v256, 0
        %v317 = vsel %vm300, %v257, 0
        %v320 = vsel %vm300, %v258, 0
        %v323 = vsel %vm300, %v259, 0
        %v326 = vsel %vm300, %v260, 0
        %v329 = vsel %vm300, %v261, 0
        %v332 = vsel %vm300, %v262, 0
        %v335 = vsel %vm300, %v263, 0
        %v338 = vsel %vm300, %v264, 0
        %v341 = vsel %vm300, %v265, 0
        %v344 = vsel %vm300, %v266, 0
        %v347 = vsel %vm300, %v267, 0
        %v350 = vsel %vm300, %v284, 0
        %v353 = vsel %vm300, %v285, 0
        %v356 = vsel %vm300, %v286, 0
        %v359 = vsel %vm300, %v287, 0
        %v362 = vsel %vm300, %v288, 0
        %v365 = vsel %vm300, %v289, 0
        %v368 = vsel %vm300, %v290, 0
        %v371 = vsel %vm300, %v291, 0
        %v374 = vsel %vm300, %v292, 0
        %v377 = vsel %vm300, %v293, 0
        %v380 = vsel %vm300, %v294, 0
        %v383 = vsel %vm300, %v295, 0
        %v386 = vsel %vm300, %v296, 0
        %v389 = vsel %vm300, %v297, 0
        %v392 = vsel %vm300, %v298, 0
        %v395 = vsel %vm300, %v299, 0
        %vm397 = vcmask 1043456
        %v399 = vsel %vm397, %v225, 0
        %401 = vmatpush.msra.mxu0 0.0
        %402 = vmatpush.msra.mxu0 0.0
        %403 = vmatpush.msra.mxu0 0.0
        %404 = vmatpush.msra.mxu0 0.0
        %405 = vmatpush.msra.mxu0 0.0
        %406 = vmatpush.msra.mxu0 0.0
        %407 = vmatpush.msra.mxu0 0.0
        %408 = vmatpush.msra.mxu0 0.0
        %409 = vmatpush.msra.mxu0 0.0
        %410 = vmatpush.msra.mxu0 0.0
        %411 = vmatpush.msra.mxu0 0.0
        %412 = vmatpush.msra.mxu0 0.0
        %413 = vmatpush.msra.mxu0 0.0
        %414 = vmatpush.msra.mxu0 0.0
        %415 = vmatpush.msra.mxu0 0.0
        %416 = vmatpush.msra.mxu0 %v399
        %417 = vmatmul.f32.gmra.mxu0 %v302
        %v418 = vpop.f32.mrf.mxu0
        %v419 = vadd.f32 %v228, %v418
        %420 = vmatmul.f32.gmra.mxu0 %v305
        %v421 = vpop.f32.mrf.mxu0
        %v422 = vadd.f32 %v228, %v421
        %423 = vmatmul.f32.gmra.mxu0 %v308
        %v424 = vpop.f32.mrf.mxu0
        %v425 = vadd.f32 %v228, %v424
        %426 = vmatmul.f32.gmra.mxu0 %v311
        %v427 = vpop.f32.mrf.mxu0
        %v428 = vadd.f32 %v228, %v427
        %429 = vmatmul.f32.gmra.mxu0 %v314
        %v430 = vpop.f32.mrf.mxu0
        %v431 = vadd.f32 %v228, %v430
        %432 = vmatmul.f32.gmra.mxu0 %v317
        %v433 = vpop.f32.mrf.mxu0
        %v434 = vadd.f32 %v228, %v433
        %435 = vmatmul.f32.gmra.mxu0 %v320
        %v436 = vpop.f32.mrf.mxu0
        %v437 = vadd.f32 %v228, %v436
        %438 = vmatmul.f32.gmra.mxu0 %v323
        %v439 = vpop.f32.mrf.mxu0
        %v440 = vadd.f32 %v228, %v439
        %441 = vmatmul.f32.gmra.mxu0 %v326
        %v442 = vpop.f32.mrf.mxu0
        %v443 = vadd.f32 %v228, %v442
        %444 = vmatmul.f32.gmra.mxu0 %v329
        %v445 = vpop.f32.mrf.mxu0
        %v446 = vadd.f32 %v228, %v445
        %447 = vmatmul.f32.gmra.mxu0 %v332
        %v448 = vpop.f32.mrf.mxu0
        %v449 = vadd.f32 %v228, %v448
        %450 = vmatmul.f32.gmra.mxu0 %v335
        %v451 = vpop.f32.mrf.mxu0
        %v452 = vadd.f32 %v228, %v451
        %453 = vmatmul.f32.gmra.mxu0 %v338
        %v454 = vpop.f32.mrf.mxu0
        %v455 = vadd.f32 %v228, %v454
        %456 = vmatmul.f32.gmra.mxu0 %v341
        %v457 = vpop.f32.mrf.mxu0
        %v458 = vadd.f32 %v228, %v457
        %459 = vmatmul.f32.gmra.mxu0 %v344
        %v460 = vpop.f32.mrf.mxu0
        %v461 = vadd.f32 %v228, %v460
        %462 = vmatmul.f32.gmra.mxu0 %v347
        %v463 = vpop.f32.mrf.mxu0
        %v464 = vadd.f32 %v228, %v463
        %465 = vmatmul.f32.gmra.mxu0 %v350
        %v466 = vpop.f32.mrf.mxu0
        %v467 = vadd.f32 %v228, %v466
        %468 = vmatmul.f32.gmra.mxu0 %v353
        %v469 = vpop.f32.mrf.mxu0
        %v470 = vadd.f32 %v228, %v469
        %471 = vmatmul.f32.gmra.mxu0 %v356
        %v472 = vpop.f32.mrf.mxu0
        %v473 = vadd.f32 %v228, %v472
        %474 = vmatmul.f32.gmra.mxu0 %v359
        %v475 = vpop.f32.mrf.mxu0
        %v476 = vadd.f32 %v228, %v475
        %477 = vmatmul.f32.gmra.mxu0 %v362
        %v478 = vpop.f32.mrf.mxu0
        %v479 = vadd.f32 %v228, %v478
        %480 = vmatmul.f32.gmra.mxu0 %v365
        %v481 = vpop.f32.mrf.mxu0
        %v482 = vadd.f32 %v228, %v481
        %483 = vmatmul.f32.gmra.mxu0 %v368
        %v484 = vpop.f32.mrf.mxu0
        %v485 = vadd.f32 %v228, %v484
        %486 = vmatmul.f32.gmra.mxu0 %v371
        %v487 = vpop.f32.mrf.mxu0
        %v488 = vadd.f32 %v228, %v487
        %489 = vmatmul.f32.gmra.mxu0 %v374
        %v490 = vpop.f32.mrf.mxu0
        %v491 = vadd.f32 %v228, %v490
        %492 = vmatmul.f32.gmra.mxu0 %v377
        %v493 = vpop.f32.mrf.mxu0
        %v494 = vadd.f32 %v228, %v493
        %495 = vmatmul.f32.gmra.mxu0 %v380
        %v496 = vpop.f32.mrf.mxu0
        %v497 = vadd.f32 %v228, %v496
        %498 = vmatmul.f32.gmra.mxu0 %v383
        %v499 = vpop.f32.mrf.mxu0
        %v500 = vadd.f32 %v228, %v499
        %501 = vmatmul.f32.gmra.mxu0 %v386
        %v502 = vpop.f32.mrf.mxu0
        %v503 = vadd.f32 %v228, %v502
        %504 = vmatmul.f32.gmra.mxu0 %v389
        %v505 = vpop.f32.mrf.mxu0
        %v506 = vadd.f32 %v228, %v505
        %507 = vmatmul.f32.gmra.mxu0 %v392
        %v508 = vpop.f32.mrf.mxu0
        %v509 = vadd.f32 %v228, %v508
        %510 = vmatmul.f32.gmra.mxu0 %v395
        %v511 = vpop.f32.mrf.mxu0
        %v512 = vadd.f32 %v228, %v511
        %513 = vdwg.mxu0
        %514 = vst [vmem:[%s221] sm:$0xff] %v419
        %515 = vst [vmem:[%s221 + $0x8] sm:$0xff] %v422
        %516 = vst [vmem:[%s221 + $0x10] sm:$0xff] %v425
        %517 = vst [vmem:[%s221 + $0x18] sm:$0xff] %v428
        %518 = vst [vmem:[%s221 + $0x20] sm:$0xff] %v431
        %519 = vst [vmem:[%s221 + $0x28] sm:$0xff] %v434
        %520 = vst [vmem:[%s221 + $0x30] sm:$0xff] %v437
        %521 = vst [vmem:[%s221 + $0x38] sm:$0xff] %v440
        %522 = vst [vmem:[%s221 + $0x40] sm:$0xff] %v443
        %523 = vst [vmem:[%s221 + $0x48] sm:$0xff] %v446
        %524 = vst [vmem:[%s221 + $0x50] sm:$0xff] %v449
        %525 = vst [vmem:[%s221 + $0x58] sm:$0xff] %v452
        %526 = vst [vmem:[%s221 + $0x60] sm:$0xff] %v455
        %527 = vst [vmem:[%s221 + $0x68] sm:$0xff] %v458
        %528 = vst [vmem:[%s221 + $0x70] sm:$0xff] %v461
        %529 = vst [vmem:[%s221 + $0x78] sm:$0xff] %v464
        %530 = vst [vmem:[%s221 + $0x80] sm:$0xff] %v467
        %531 = vst [vmem:[%s221 + $0x88] sm:$0xff] %v470
        %532 = vst [vmem:[%s221 + $0x90] sm:$0xff] %v473
        %533 = vst [vmem:[%s221 + $0x98] sm:$0xff] %v476
        %534 = vst [vmem:[%s221 + $0xa0] sm:$0xff] %v479
        %535 = vst [vmem:[%s221 + $0xa8] sm:$0xff] %v482
        %536 = vst [vmem:[%s221 + $0xb0] sm:$0xff] %v485
        %537 = vst [vmem:[%s221 + $0xb8] sm:$0xff] %v488
        %538 = vst [vmem:[%s221 + $0xc0] sm:$0xff] %v491
        %539 = vst [vmem:[%s221 + $0xc8] sm:$0xff] %v494
        %540 = vst [vmem:[%s221 + $0xd0] sm:$0xff] %v497
        %541 = vst [vmem:[%s221 + $0xd8] sm:$0xff] %v500
        %542 = vst [vmem:[%s221 + $0xe0] sm:$0xff] %v503
        %543 = vst [vmem:[%s221 + $0xe8] sm:$0xff] %v506
        %544 = vst [vmem:[%s221 + $0xf0] sm:$0xff] %v509
        %545 = vst [vmem:[%s221 + $0xf8] sm:$0xff] %v512
        %s546 = sand.u32 %s113, 1
        %s547 = scalar_lea.sflag [#allocation4], %s546
        %s548 = sand.u32 %s113, 1
        %s549 = smul.addr %s548, 256
        %s550 = scalar_lea.vmem [#allocation7], %s549
        // Predicated region
        $region41: #{tpu_custom_call.1} parent=31 // pred_check
          %p551 = pneg %p123
        $region42: #{tpu_custom_call.1} parent=31 // pred_check_branch
          %553 = sbr.rel (%p551) target = $region44
        $region43: #{tpu_custom_call.1} parent=31 // pred_region
          %s554 = smul.u32 32, %s26
          %556 = vsyncadd %s547, 0
          %s557 = smul.addr %s25, 32
          %s558 = sadd.s32 %s554, %s557
          %s559 = smul.addr %s558, 8
          %s560 = scalar_lea.hbm %s3, %s559
          %s561 = sshll.u32 %s550, 4
          %s562 = int_to_ptr.vmem [resolvable:$true] %s561
          %s563 = sshll.u32 %s560, 4
          %s564 = int_to_ptr.hbm [resolvable:$true] %s563
          %569 = dma.vmem_to_hbm [thread:$0]  %s562, 4096, %s564, %s547, 128, 128, 8
        $region44: #{tpu_custom_call.1} parent=31 // pred_fallthru
          _
      $region32: #{tpu_custom_call.1} parent=5 // pred_fallthru
        _
      %p570 = scmp.le.s32.totalorder 2, %s16
      // Predicated region
      $region45: #{tpu_custom_call.1} parent=5 // pred_check
        %p571 = pneg %p570
      $region46: #{tpu_custom_call.1} parent=5 // pred_check_branch
        %573 = sbr.rel (%p571) target = $region48
      $region47: #{tpu_custom_call.1} parent=5 // pred_region
        %s574 = ssub.s32 %s16, 2
        // Predicated region
        $region49: #{tpu_custom_call.1} parent=47 // pred_check
          %p575 = pneg %p129
        $region50: #{tpu_custom_call.1} parent=47 // pred_check_branch
          %577 = sbr.rel (%p575) target = $region52
        $region51: #{tpu_custom_call.1} parent=47 // pred_region
          %s578 = sand.u32 %s114, 1
          %s579 = scalar_lea.sflag [#allocation4], %s578
          %s580 = sand.u32 %s114, 1
          %s581 = smul.addr %s580, 256
          %s582 = scalar_lea.vmem [#allocation7], %s581
          %584 = dma.done %s579, 4096
        $region52: #{tpu_custom_call.1} parent=47 // pred_fallthru
          _
      $region48: #{tpu_custom_call.1} parent=5 // pred_fallthru
        _
    $region6: #{tpu_custom_call.1} parent=1 // loop_footer
      %s20 = sadd.s32 1, %s16
    $region7: #{tpu_custom_call.1} parent=1 // loop_footer_branch
      %15 = sbr.rel target = $region3
    $region8: #{tpu_custom_call.1} parent=1 // loop_exit
      _
    %585 = vsyncpa [#allocation3], 1
    %s586 = scalar_lea.sflag [#allocation3], 1
    %587 = vsyncpa %s586, 1
    %588 = vsyncpa [#allocation6], 1
    %589 = vsyncpa [#allocation4], 1
    %s590 = scalar_lea.sflag [#allocation4], 1
    %591 = vsyncpa %s590, 1

</llo_original>
